<compile_context>
chip_gen: v7x
topology: tpu7x:2x2x1
jax: 0.10.0
libtpu: 0.0.40
codegen_flags: <defaults>
</compile_context>

<pallas_src>
import jax
import jax.numpy as jnp
from jax.experimental import pallas as pl
from jax.experimental.pallas import tpu as pltpu

_LANES = 128
_TARGET_TILE_BYTES = 2 * 1024 * 1024  # ~2 MiB per tile (per buffer)


def _intensity_kernel(scale):
    def kernel(r_ref, x_ref, o_ref):
        b = pl.program_id(0)
        r = r_ref[b]                                   # SMEM scalar, read first
        noise = 1.0 + scale * jnp.clip(r, -2.0, 2.0)   # clamp + affine (f32)
        o_ref[...] = x_ref[...] * noise.astype(o_ref.dtype)
    return kernel


def _pick_row_tile(R, B, itemsize):
    """Sublane row-tile: multiple of the packed sublane count, ~2 MiB, and
    split so the grid has >= 2 blocks when possible (v7x dual TensorCore)."""
    pack = max(8, 32 // max(int(itemsize), 1))          # 8 f32, 16 bf16, 32 i8
    target_rows = max(pack,
                      (_TARGET_TILE_BYTES // (_LANES * itemsize) // pack) * pack)
    Rt = min(R, int(target_rows))
    if Rt >= pack:
        Rt = (Rt // pack) * pack
    else:
        Rt = R                                          # full-extent block is legal
    num_row_tiles = -(-R // Rt)
    if B * num_row_tiles < 2 and R >= 2 * pack:
        half = -(-R // 2)
        Rt = max(pack, (half // pack) * pack)
    return Rt


def intensity(x, r, scale):
    """x: (B, C, H, W) (any elementwise-broadcastable trailing dims),
    r: (B,) float32 standard-normal draws (stand-in for torch.randn)."""
    # NOTE: `scale` is baked in as a compile-time constant (module attribute in
    # the PyTorch spec). Pass it as an SMEM scalar instead if it varies at runtime.
    orig_shape = x.shape
    B = int(orig_shape[0])
    F = 1
    for d in orig_shape[1:]:
        F *= int(d)

    itemsize = jnp.dtype(x.dtype).itemsize
    lane_aligned = (F % _LANES == 0)

    if lane_aligned:
        R = F // _LANES
        x3 = x.reshape(B, R, _LANES)                    # zero-copy lane-dense view
    else:
        # Ragged feature count: pad flattened features to the next 128 multiple.
        # TODO(synk): for ragged F a whole-tensor (B*F) layout with in-kernel
        # batch-id iota would avoid this pad/crop round trip.
        F_pad = ((F + _LANES - 1) // _LANES) * _LANES
        R = F_pad // _LANES
        x_flat = jnp.pad(x.reshape(B, F), ((0, 0), (0, F_pad - F)))
        x3 = x_flat.reshape(B, R, _LANES)

    Rt = _pick_row_tile(R, B, itemsize)
    grid = (B, pl.cdiv(R, Rt))                          # ragged last tile is masked

    cost = pl.CostEstimate(
        flops=2 * B * R * _LANES,
        transcendentals=0,
        bytes_accessed=2 * B * R * _LANES * itemsize,
    )

    out3 = pl.pallas_call(
        _intensity_kernel(float(scale)),
        out_shape=jax.ShapeDtypeStruct((B, R, _LANES), x.dtype),
        grid_spec=pltpu.PrefetchScalarGridSpec(
            num_scalar_prefetch=1,                      # r lands in SMEM
            grid=grid,
            in_specs=[pl.BlockSpec((1, Rt, _LANES),
                                   lambda b, c, r_ref: (b, c, 0))],
            out_specs=pl.BlockSpec((1, Rt, _LANES),
                                   lambda b, c, r_ref: (b, c, 0)),
        ),
        compiler_params=pltpu.CompilerParams(
            dimension_semantics=("parallel", "parallel")),
        cost_estimate=cost,
    )(r, x3)

    if lane_aligned:
        return out3.reshape(orig_shape)                 # zero-copy reshape back
    return out3.reshape(B, R * _LANES)[:, :F].reshape(orig_shape)


if __name__ == "__main__":
    key = jax.random.PRNGKey(0)
    kx, kr = jax.random.split(key)

    B, C, H, W = 2, 4, 16, 16
    scale = 0.1

    x = jax.random.normal(kx, (B, C, H, W), dtype=jnp.float32)
    # Deterministic stand-in for torch.randn((B, 1, 1, 1)) -- drawn in glue,
    # consumed inside the kernel.
    r = jax.random.normal(kr, (B,), dtype=jnp.float32)

    out = intensity(x, r, scale)
    out = jax.block_until_ready(out)

    # Pure-JAX reference check
    noise_ref = 1.0 + scale * jnp.clip(r, -2.0, 2.0)
    ref = x * noise_ref[:, None, None, None]
    assert out.shape == x.shape and out.dtype == x.dtype
    assert jnp.allclose(out, ref, atol=1e-6, rtol=1e-6)

    print("KERNEL_OK")
</pallas_src>

<mosaic_0001>
module attributes {stable_mosaic.version = 11 : i64} {
  func.func @kernel(%arg0: i32, %arg1: i32, %arg2: memref<2xf32, #tpu.memory_space<smem>>, %arg3: memref<1x8x128xf32, #tpu.memory_space<vmem>>, %arg4: memref<1x8x128xf32, #tpu.memory_space<vmem>>) attributes {dimension_semantics = [#tpu.dimension_semantics<parallel>, #tpu.dimension_semantics<parallel>], iteration_bounds = array<i64: 2, 1>, scalar_prefetch = 1 : i64, scratch_operands = 0 : i64, tpu.core_type = #tpu.core_type<tc>, window_params = [{transform_indices = @transform_0, window_bounds = array<i64: 1, 8, 128>}, {transform_indices = @transform_1, window_bounds = array<i64: 1, 8, 128>}]} {
    %0 = arith.index_cast %arg0 : i32 to index
    %1 = memref.load %arg2[%0] : memref<2xf32, #tpu.memory_space<smem>>
    %cst = arith.constant -2.000000e+00 : f32
    %cst_0 = arith.constant 2.000000e+00 : f32
    %2 = arith.maximumf %cst, %1 : f32
    %3 = arith.minimumf %cst_0, %2 : f32
    %cst_1 = arith.constant 1.000000e-01 : f32
    %4 = arith.mulf %cst_1, %3 : f32
    %cst_2 = arith.constant 1.000000e+00 : f32
    %5 = arith.addf %cst_2, %4 : f32
    %c0 = arith.constant 0 : index
    %c0_3 = arith.constant 0 : index
    %c0_4 = arith.constant 0 : index
    %6 = vector.load %arg3[%c0, %c0_3, %c0_4] : memref<1x8x128xf32, #tpu.memory_space<vmem>>, vector<1x8x128xf32>
    %7 = vector.broadcast %5 : f32 to vector<1x8x128xf32>
    %8 = arith.mulf %6, %7 : vector<1x8x128xf32>
    %c0_5 = arith.constant 0 : index
    %c0_6 = arith.constant 0 : index
    %c0_7 = arith.constant 0 : index
    %9 = vector.load %arg4[%c0_5, %c0_6, %c0_7] : memref<1x8x128xf32, #tpu.memory_space<vmem>>, vector<1x8x128xf32>
    tpu.vector_store %arg4[%c0_5, %c0_6, %c0_7], %8 {strides = array<i32>} : memref<1x8x128xf32, #tpu.memory_space<vmem>>, vector<1x8x128xf32>,
    return
  }
  func.func @transform_0(%arg0: i32, %arg1: i32, %arg2: memref<2xf32, #tpu.memory_space<smem>>) -> (i32, i32, i32) {
    %c0_i32 = arith.constant 0 : i32
    %c0_i32_0 = arith.constant 0 : i32
    return %arg0, %arg1, %c0_i32 : i32, i32, i32
  }
  func.func @transform_1(%arg0: i32, %arg1: i32, %arg2: memref<2xf32, #tpu.memory_space<smem>>) -> (i32, i32, i32) {
    %c0_i32 = arith.constant 0 : i32
    %c0_i32_0 = arith.constant 0 : i32
    return %arg0, %arg1, %c0_i32 : i32, i32, i32
  }
}

</mosaic_0001>

<llo_original>
// kernel: tpu_custom_call.1
$region0: #{tpu_custom_call.1}
  #allocation0 [shape = 'u32[]', space=smem, size = 0x4, offset = 0x4, fixed_abs, tag = 'smem constant byte address 0x4 - core index']
  #allocation1 [shape = 'u32[144,128]{1,0:T(1,128)}', space=vmem, size = 0x12000, scoped, tag = 'internal scratch']
  #allocation2 [shape = 's32[1]{0}', space=sflag, size = 0x4, scoped, tag = 'scoped memory for tpu_custom_call.1']
  #allocation3 [shape = 'u8[512]{0}', space=smem, size = 0x200, scoped, tag = 'prefetched SMEM operand 0']
  %s0 = inlined_call_operand.hbm [shape: f32[2], index: 0, kind: input, shape index: {}]
  %s1 = inlined_call_operand.hbm [shape: f32[2,8,128], index: 1, kind: input, shape index: {}]
  %s2 = inlined_call_operand.hbm [shape: f32[2,8,128], index: 2, kind: output, shape index: {}]
  %s3 = sld [smem:[#allocation0]]
  $region41: #{tpu_custom_call.1} parent=0
    _
  %s5 = ssub.s32 1, %s3
  %s6 = scalar_select 0, %s5, %s3
  %8 = dma.hbm_to_smem %s0, 16, [#allocation3], [#allocation2]
  %9 = dma.done [#allocation2], 16
  %10 = sfence
  $region1: #{tpu_custom_call.1} parent=0
    #allocation4 [shape = 'u8[8192]{0}', space=vmem, size = 0x2000, scoped, tag = 'input window, operand 1']
    #allocation5 [shape = 's32[2]{0}', space=sflag, size = 0x8, scoped, tag = 'scoped memory for tpu_custom_call.1']
    #allocation6 [shape = 's32[2]{0}', space=sflag, size = 0x8, scoped, tag = 'scoped memory for tpu_custom_call.1']
    #allocation7 [shape = 'u8[8192]{0}', space=vmem, size = 0x2000, scoped, tag = 'output window, operand 0']
    %11 = vsyncpa [#allocation5], 0
    %s12 = scalar_lea.sflag [#allocation5], 1
    %13 = vsyncpa %s12, 0
    %14 = vsyncpa [#allocation6], 0
    %s15 = scalar_lea.sflag [#allocation6], 1
    %16 = vsyncpa %s15, 0
    loop: start=0, step=1, limit=4
    $region2: #{tpu_custom_call.1} parent=1 // loop_pre_header
      _
    $region3: #{tpu_custom_call.1} parent=1 // loop_header
      %s18 = sphi 0, %s22
      %p19 = scmp.ge.s32.totalorder %s18, 4
      %s25 = sphi 0, %s37
      %s26 = sphi 0, %s33
      %s27 = sphi 0, %s25
      %s28 = sphi 0, %s26
      %s29 = sphi 0, %s27
      %s30 = sphi 0, %s28
      %s42 = sphi 0, %s44
      %s45 = sphi 0, %s42
      %s46 = sphi 0, %s45
      %s62 = sphi 0, %s46
      %s70 = sphi 0, %s72
      %s73 = sphi 0, %s70
      %s74 = sphi 0, %s73
      %s90 = sphi 0, %s74
    $region4: #{tpu_custom_call.1} parent=1 // loop_header_branch
      %21 = sbr.rel (%p19) target = $region8
    $region5: #{tpu_custom_call.1} parent=1 // loop_body
      %s23 = ssub.s32 %s18, 1
      %s24 = ssub.s32 %s18, 2
      %s31 = sadd.s32 1, %s26
      %p32 = scmp.ge.s32.totalorder %s31, 1
      %s33 = scalar_select %p32, 0, %s31
      %s34 = sadd.s32 1, %s25
      %s35 = scalar_select %p32, %s34, %s25
      %p36 = scmp.ge.s32.totalorder %s35, 2
      %s37 = scalar_select %p36, 0, %s35
      %s38 = ssub.s32 %s25, %s37
      %s39 = ssub.s32 %s26, %s33
      %s40 = sor.u32 %s38, %s39
      %p41 = scmp.eq.s32.totalorder %s40, 0
      %s43 = sadd.s32 %s42, 1
      %s44 = scalar_select %p41, %s42, %s43
      %p47 = pneg %p41
      %p48 = scmp.eq.s32.totalorder %s18, 1
      %p49 = por %p47, %p48
      %p50 = scmp.ne.s32.totalorder %s42, %s45
      %p51 = scmp.eq.s32.totalorder %s18, 0
      %p52 = por %p50, %p51
      %p53 = scmp.ne.s32.totalorder %s42, %s45
      %p54 = scmp.eq.s32.totalorder %s23, 1
      %p55 = por %p53, %p54
      %p56 = scmp.ne.s32.totalorder %s45, %s46
      %p57 = scmp.eq.s32.totalorder %s23, 0
      %p58 = por %p56, %p57
      %p59 = scmp.ne.s32.totalorder %s45, %s46
      %p60 = scmp.eq.s32.totalorder %s24, 1
      %p61 = por %p59, %p60
      %p63 = scmp.ne.s32.totalorder %s46, %s62
      %p64 = scmp.eq.s32.totalorder %s24, 0
      %p65 = por %p63, %p64
      %s66 = ssub.s32 %s25, %s37
      %s67 = ssub.s32 %s26, %s33
      %s68 = sor.u32 %s66, %s67
      %p69 = scmp.eq.s32.totalorder %s68, 0
      %s71 = sadd.s32 %s70, 1
      %s72 = scalar_select %p69, %s70, %s71
      %p75 = pneg %p69
      %p76 = scmp.eq.s32.totalorder %s18, 1
      %p77 = por %p75, %p76
      %p78 = scmp.ne.s32.totalorder %s70, %s73
      %p79 = scmp.eq.s32.totalorder %s18, 0
      %p80 = por %p78, %p79
      %p81 = scmp.ne.s32.totalorder %s70, %s73
      %p82 = scmp.eq.s32.totalorder %s23, 1
      %p83 = por %p81, %p82
      %p84 = scmp.ne.s32.totalorder %s73, %s74
      %p85 = scmp.eq.s32.totalorder %s23, 0
      %p86 = por %p84, %p85
      %p87 = scmp.ne.s32.totalorder %s73, %s74
      %p88 = scmp.eq.s32.totalorder %s24, 1
      %p89 = por %p87, %p88
      %p91 = scmp.ne.s32.totalorder %s74, %s90
      %p92 = scmp.eq.s32.totalorder %s24, 0
      %p93 = por %p91, %p92
      %p94 = scmp.le.s32.totalorder 1, %s18
      %p95 = scmp.lt.s32.totalorder %s18, 3
      %p96 = pnand %p94, %p95
      %p97 = pneg %p96
      // Predicated region
      $region9: #{tpu_custom_call.1} parent=5 // pred_check
        _
      $region10: #{tpu_custom_call.1} parent=5 // pred_check_branch
        %99 = sbr.rel (%p96) target = $region12
      $region11: #{tpu_custom_call.1} parent=5 // pred_region
        %s100 = ssub.s32 %s18, 1
      $region12: #{tpu_custom_call.1} parent=5 // pred_fallthru
        _
      %p101 = scmp.lt.s32.totalorder %s18, 2
      // Predicated region
      $region13: #{tpu_custom_call.1} parent=5 // pred_check
        %p102 = pneg %p101
      $region14: #{tpu_custom_call.1} parent=5 // pred_check_branch
        %104 = sbr.rel (%p102) target = $region16
      $region15: #{tpu_custom_call.1} parent=5 // pred_region
        // Predicated region
        $region17: #{tpu_custom_call.1} parent=15 // pred_check
          %p105 = pneg %p52
        $region18: #{tpu_custom_call.1} parent=15 // pred_check_branch
          %107 = sbr.rel (%p105) target = $region20
        $region19: #{tpu_custom_call.1} parent=15 // pred_region
          %s108 = sand.u32 %s42, 1
          %s109 = scalar_lea.sflag [#allocation5], %s108
          %s110 = sand.u32 %s42, 1
          %s111 = smul.addr %s110, 8
          %s112 = scalar_lea.vmem [#allocation4], %s111
          %s114 = ssub.s32 128, 128
          %115 = vsyncadd %s109, %s114
          %s116 = sadd.s32 %s26, %s25
          %s117 = smul.addr %s116, 128
          %s118 = scalar_lea.hbm %s1, %s117
          %s120 = sshll.u32 %s112, 4
          %s121 = int_to_ptr.vmem [resolvable:$true] %s120
          %123 = dma.hbm_to_vmem [thread:$0]  %s118, 128, %s121, %s109
        $region20: #{tpu_custom_call.1} parent=15 // pred_fallthru
          _
      $region16: #{tpu_custom_call.1} parent=5 // pred_fallthru
        _
      %p124 = scmp.le.s32.totalorder 1, %s18
      %p125 = scmp.lt.s32.totalorder %s18, 3
      %p126 = pnand %p124, %p125
      %p127 = pneg %p126
      // Predicated region
      $region21: #{tpu_custom_call.1} parent=5 // pred_check
        _
      $region22: #{tpu_custom_call.1} parent=5 // pred_check_branch
        %129 = sbr.rel (%p126) target = $region24
      $region23: #{tpu_custom_call.1} parent=5 // pred_region
        %s130 = ssub.s32 %s18, 1
        %s131 = sand.u32 %s45, 1
        %s132 = scalar_lea.sflag [#allocation5], %s131
        %s133 = sand.u32 %s45, 1
        %s134 = smul.addr %s133, 8
        %s135 = scalar_lea.vmem [#allocation4], %s134
        // Predicated region
        $region25: #{tpu_custom_call.1} parent=23 // pred_check
          %p136 = pneg %p58
        $region26: #{tpu_custom_call.1} parent=23 // pred_check_branch
          %138 = sbr.rel (%p136) target = $region28
        $region27: #{tpu_custom_call.1} parent=23 // pred_region
          %139 = dma.done %s132, 128
        $region28: #{tpu_custom_call.1} parent=23 // pred_fallthru
          _
        %s140 = sand.u32 %s45, 1
        %s141 = scalar_lea.sflag [#allocation5], %s140
        %s142 = sand.u32 %s45, 1
        %s143 = smul.addr %s142, 8
        %s144 = scalar_lea.vmem [#allocation4], %s143
        %p145 = pneg %p58
        %p146 = pneg %p55
        %p147 = pneg %p86
        %p148 = pneg %p83
        %s149 = sand.u32 %s73, 1
        %s150 = scalar_lea.sflag [#allocation6], %s149
        %s151 = sand.u32 %s73, 1
        %s152 = smul.addr %s151, 8
        %s153 = scalar_lea.vmem [#allocation7], %s152
        %s154 = sld [smem:[#allocation3 + %s27]]
        %s155 = smax.f32 %s154, -2.0
        %s156 = smin.f32 %s155, 2.0
        %s157 = smul.f32 %s156, 0.1
        %s158 = sadd.f32 %s157, 1.0
        %v159 = vld [vmem:[%s135] sm:$0xff]
        %v160 = vstv %s158
        %v161 = vmul.f32 %v159, %v160
        %162 = vst [vmem:[%s153] sm:$0xff] %v161
        %s163 = sand.u32 %s73, 1
        %s164 = scalar_lea.sflag [#allocation6], %s163
        %s165 = sand.u32 %s73, 1
        %s166 = smul.addr %s165, 8
        %s167 = scalar_lea.vmem [#allocation7], %s166
        // Predicated region
        $region29: #{tpu_custom_call.1} parent=23 // pred_check
          %p168 = pneg %p83
        $region30: #{tpu_custom_call.1} parent=23 // pred_check_branch
          %170 = sbr.rel (%p168) target = $region32
        $region31: #{tpu_custom_call.1} parent=23 // pred_region
          %s172 = ssub.s32 128, 128
          %173 = vsyncadd %s164, %s172
          %s174 = sadd.s32 %s28, %s27
          %s175 = smul.addr %s174, 128
          %s176 = scalar_lea.hbm %s2, %s175
          %s178 = sshll.u32 %s167, 4
          %s179 = int_to_ptr.vmem [resolvable:$true] %s178
          %181 = dma.vmem_to_hbm [thread:$0]  %s179, 128, %s176, %s164
        $region32: #{tpu_custom_call.1} parent=23 // pred_fallthru
          _
      $region24: #{tpu_custom_call.1} parent=5 // pred_fallthru
        _
      %p182 = scmp.le.s32.totalorder 2, %s18
      // Predicated region
      $region33: #{tpu_custom_call.1} parent=5 // pred_check
        %p183 = pneg %p182
      $region34: #{tpu_custom_call.1} parent=5 // pred_check_branch
        %185 = sbr.rel (%p183) target = $region36
      $region35: #{tpu_custom_call.1} parent=5 // pred_region
        %s186 = ssub.s32 %s18, 2
        // Predicated region
        $region37: #{tpu_custom_call.1} parent=35 // pred_check
          %p187 = pneg %p89
        $region38: #{tpu_custom_call.1} parent=35 // pred_check_branch
          %189 = sbr.rel (%p187) target = $region40
        $region39: #{tpu_custom_call.1} parent=35 // pred_region
          %s190 = sand.u32 %s74, 1
          %s191 = scalar_lea.sflag [#allocation6], %s190
          %s192 = sand.u32 %s74, 1
          %s193 = smul.addr %s192, 8
          %s194 = scalar_lea.vmem [#allocation7], %s193
          %195 = dma.done %s191, 128
        $region40: #{tpu_custom_call.1} parent=35 // pred_fallthru
          _
      $region36: #{tpu_custom_call.1} parent=5 // pred_fallthru
        _
    $region6: #{tpu_custom_call.1} parent=1 // loop_footer
      %s22 = sadd.s32 1, %s18
    $region7: #{tpu_custom_call.1} parent=1 // loop_footer_branch
      %17 = sbr.rel target = $region3
    $region8: #{tpu_custom_call.1} parent=1 // loop_exit
      _
    %196 = vsyncpa [#allocation5], 1
    %s197 = scalar_lea.sflag [#allocation5], 1
    %198 = vsyncpa %s197, 1
    %199 = vsyncpa [#allocation6], 1
    %s200 = scalar_lea.sflag [#allocation6], 1
    %201 = vsyncpa %s200, 1

</llo_original>
